<compile_context>
chip_gen: v7x
topology: tpu7x:2x2x1
jax: 0.10.0
libtpu: 0.0.40
codegen_flags: <defaults>
</compile_context>

<pallas_src>
import functools
import math

import jax
import jax.numpy as jnp
from jax.experimental import pallas as pl
from jax.experimental.pallas import tpu as pltpu

LN_EPS = 1e-5   # PyTorch LayerNorm default eps
LANE = 128      # TPU lane width


def _round_up(v, m):
    return (v + m - 1) // m * m


def _layer_norm_relu(h, gamma, beta, lane_mask, inv_c):
    """LayerNorm over the true channels (padded lanes of h are exactly 0) + ReLU, f32 math."""
    mu = jnp.sum(h, axis=-1, keepdims=True) * inv_c
    d = jnp.where(lane_mask, h - mu, 0.0)               # centered; padded lanes forced to 0
    var = jnp.sum(d * d, axis=-1, keepdims=True) * inv_c
    y = d * jax.lax.rsqrt(var + LN_EPS) * gamma + beta   # padded gamma/beta are 0 -> stay 0
    return jnp.maximum(y, 0.0)


def fc_resblock_kernel(x_ref, w1s_ref, w2_ref, vec_ref, o_ref, *, c_out, c_pad):
    mm_dtype = w1s_ref.dtype                  # bf16 (default) or f32 matmul-operand dtype
    inv_c = 1.0 / c_out
    lane = jax.lax.broadcasted_iota(jnp.int32, (1, c_pad), 1)
    lane_mask = lane < c_out

    b1, g1, be1 = vec_ref[0:1, :], vec_ref[1:2, :], vec_ref[2:3, :]
    b2, g2, be2 = vec_ref[3:4, :], vec_ref[4:5, :], vec_ref[5:6, :]
    bs = vec_ref[6:7, :]

    # Fused lin1 || shortcut: both share LHS x and K=c_in -> one MXU pass, lane-aligned split.
    fused = jnp.dot(x_ref[...], w1s_ref[...], preferred_element_type=jnp.float32)
    h = fused[:, :c_pad] + b1          # lin1(x)
    sc = fused[:, c_pad:] + bs         # shortcut(x)

    h = _layer_norm_relu(h, g1, be1, lane_mask, inv_c)           # norm1 + relu (dropout p=0)

    h2 = jnp.dot(h.astype(mm_dtype), w2_ref[...],
                 preferred_element_type=jnp.float32) + b2        # lin2
    h2 = _layer_norm_relu(h2, g2, be2, lane_mask, inv_c)         # norm2 + relu (dropout p=0)

    # Residual add; store only the true channels -> unpadded output, no extra HBM pass.
    o_ref[...] = (h2 + sc)[:, :c_out].astype(o_ref.dtype)


def fc_residual_block(x, params, *, tile_n=512, dropout_prob=0.0, out_dtype=jnp.float32):
    """Forward pass of FCResidualBlock. x: (n, c_in) -> (n, c_out)."""
    if dropout_prob != 0.0:
        # TODO(synk): add pltpu.prng_seed / prng_random_bits dropout mask for p > 0.
        raise NotImplementedError("Kernel implements the default dropout_prob=0.0 only.")

    n, c_in = x.shape
    c_out, c_pad = params["c_out"], params["c_pad"]
    w1s, w2, vec = params["w1s"], params["w2"], params["vec"]
    assert w1s.shape == (c_in, 2 * c_pad) and w2.shape == (c_pad, c_pad)

    mm_dtype = w1s.dtype
    x_mm = x if x.dtype == mm_dtype else x.astype(mm_dtype)   # halves x HBM bytes for bf16

    # Batch tile: multiple of 8 sublanes; guarantee >= 2 grid steps when n allows so
    # double-buffering overlaps DMA with compute and v7x megacore shards the batch axis.
    block_n = min(tile_n, n)
    if block_n >= n:
        if n >= 16:
            block_n = (((n + 1) // 2) + 7) // 8 * 8
    else:
        block_n = max(8, block_n // 8 * 8)
    grid = (pl.cdiv(n, block_n),)

    # Weights / packed vectors: whole array + constant index_map -> VMEM-resident across steps.
    def const_spec(a):
        return pl.BlockSpec(a.shape, lambda i: (0, 0))

    flops = 2 * n * (c_in * 2 * c_pad + c_pad * c_pad)         # fused(lin1+shortcut) + lin2
    bytes_accessed = (x_mm.size * x_mm.dtype.itemsize
                      + n * c_out * jnp.dtype(out_dtype).itemsize
                      + sum(a.size * a.dtype.itemsize for a in (w1s, w2, vec)))

    kernel = functools.partial(fc_resblock_kernel, c_out=c_out, c_pad=c_pad)

    return pl.pallas_call(
        kernel,
        out_shape=jax.ShapeDtypeStruct((n, c_out), out_dtype),
        grid=grid,
        in_specs=[pl.BlockSpec((block_n, c_in), lambda i: (i, 0)),
                  const_spec(w1s), const_spec(w2), const_spec(vec)],
        out_specs=pl.BlockSpec((block_n, c_out), lambda i: (i, 0)),
        compiler_params=pltpu.CompilerParams(dimension_semantics=("parallel",)),
        cost_estimate=pl.CostEstimate(flops=flops, transcendentals=2 * n,
                                      bytes_accessed=bytes_accessed),
    )(x_mm, w1s, w2, vec)


def make_params(key, c_in, c_out, weight_dtype=jnp.bfloat16):
    """PyTorch-default-initialized Linear/LayerNorm params, packed/padded for the kernel.

    bf16 is the default matmul-operand dtype (MXU-native on v5e/v6e/v7x); accumulation is
    always f32. Pass weight_dtype=jnp.float32 for strict validation. Padded weight columns,
    biases, gamma and beta are zero, so padded lanes stay exactly 0 through the whole block.
    """
    c_pad = _round_up(c_out, LANE)
    k1, k2, k3 = jax.random.split(key, 3)

    def linear(k, fan_in, fan_out):
        kw, kb = jax.random.split(k)
        bound = 1.0 / math.sqrt(fan_in)
        w = jax.random.uniform(kw, (fan_in, fan_out), jnp.float32, -bound, bound)
        b = jax.random.uniform(kb, (fan_out,), jnp.float32, -bound, bound)
        return w, b

    w1, b1 = linear(k1, c_in, c_out)
    w2, b2 = linear(k2, c_out, c_out)
    ws, bs = linear(k3, c_in, c_out)
    gamma = jnp.ones((c_out,), jnp.float32)
    beta = jnp.zeros((c_out,), jnp.float32)

    padw = lambda w, r, c: jnp.pad(w, ((0, r - w.shape[0]), (0, c - w.shape[1])))
    padv = lambda v: jnp.pad(v, (0, c_pad - v.shape[0]))

    # Fused lin1 || shortcut weight (shared LHS): one (c_in, 2*c_pad) MXU operand.
    w1s = jnp.concatenate([padw(w1, c_in, c_pad), padw(ws, c_in, c_pad)], axis=1)
    w2p = padw(w2, c_pad, c_pad)
    # Pack the seven per-channel vectors into one (8, c_pad) resident f32 operand.
    vec = jnp.stack([padv(b1), padv(gamma), padv(beta),
                     padv(b2), padv(gamma), padv(beta),
                     padv(bs), jnp.zeros((c_pad,), jnp.float32)], axis=0)

    return dict(w1s=w1s.astype(weight_dtype), w2=w2p.astype(weight_dtype), vec=vec,
                c_out=c_out, c_pad=c_pad,
                raw=dict(w1=w1, b1=b1, w2=w2, b2=b2, ws=ws, bs=bs,
                         g1=gamma, be1=beta, g2=gamma, be2=beta))


def reference(x, p):
    """Pure-JAX f32 reference matching PyTorch FCResidualBlock (unpadded params)."""
    r = p["raw"]
    hi = jax.lax.Precision.HIGHEST

    def ln(h, g, b):
        mu = h.mean(-1, keepdims=True)
        var = ((h - mu) ** 2).mean(-1, keepdims=True)
        return (h - mu) / jnp.sqrt(var + LN_EPS) * g + b

    h = jnp.maximum(ln(jnp.dot(x, r["w1"], precision=hi) + r["b1"], r["g1"], r["be1"]), 0.0)
    h = jnp.maximum(ln(jnp.dot(h, r["w2"], precision=hi) + r["b2"], r["g2"], r["be2"]), 0.0)
    return h + jnp.dot(x, r["ws"], precision=hi) + r["bs"]


if __name__ == "__main__":
    N, C_IN, C_OUT = 256, 32, 64      # in_channels != out_channels -> shortcut Linear active
    key = jax.random.PRNGKey(0)
    kx, kp = jax.random.split(key)
    x = jax.random.normal(kx, (N, C_IN), jnp.float32)

    # 1) f32 matmul operands: strict numerical check (grid of 2 x 128-row tiles).
    p_f32 = make_params(kp, C_IN, C_OUT, weight_dtype=jnp.float32)
    out_f32 = jax.block_until_ready(fc_residual_block(x, p_f32, tile_n=128))
    ref = reference(x, p_f32)
    assert out_f32.shape == (N, C_OUT)
    err_f32 = float(jnp.max(jnp.abs(out_f32 - ref)))
    assert jnp.allclose(out_f32, ref, atol=5e-3, rtol=5e-3), f"f32 max err {err_f32}"

    # 2) bf16 matmul operands (default fast path, f32 accumulation) with the default tile_n:
    #    exercises the grid>=2 split of a single-tile batch. Same raw weights as p_f32,
    #    so compare against the same f32 reference with a loose tolerance.
    p_bf16 = make_params(kp, C_IN, C_OUT)          # weight_dtype=bf16 default
    out_bf16 = jax.block_until_ready(fc_residual_block(x, p_bf16))
    assert out_bf16.shape == (N, C_OUT)
    assert bool(jnp.all(jnp.isfinite(out_bf16)))
    err_bf16 = float(jnp.max(jnp.abs(out_bf16 - ref)))
    assert jnp.allclose(out_bf16, ref, atol=2.5e-1, rtol=2.5e-1), f"bf16 max err {err_bf16}"

    # 3) Ragged batch (n not a multiple of the tile): last grid block is partial.
    x3 = jax.random.normal(jax.random.PRNGKey(1), (200, C_IN), jnp.float32)
    out3 = jax.block_until_ready(fc_residual_block(x3, p_f32, tile_n=128))
    ref3 = reference(x3, p_f32)
    assert out3.shape == (200, C_OUT)
    assert jnp.allclose(out3, ref3, atol=5e-3, rtol=5e-3)

    print("KERNEL_OK")
</pallas_src>

<mosaic_0001>
module attributes {stable_mosaic.version = 11 : i64} {
  func.func @fc_resblock_kernel(%arg0: i32, %arg1: memref<128x32xf32, #tpu.memory_space<vmem>>, %arg2: memref<32x256xf32, #tpu.memory_space<vmem>>, %arg3: memref<128x128xf32, #tpu.memory_space<vmem>>, %arg4: memref<8x128xf32, #tpu.memory_space<vmem>>, %arg5: memref<128x64xf32, #tpu.memory_space<vmem>>) attributes {dimension_semantics = [#tpu.dimension_semantics<parallel>], iteration_bounds = array<i64: 2>, scalar_prefetch = 0 : i64, scratch_operands = 0 : i64, tpu.core_type = #tpu.core_type<tc>, window_params = [{transform_indices = @transform_0, window_bounds = array<i64: 128, 32>}, {pipeline_mode = #tpu.pipeline_mode<synchronous>, transform_indices = @transform_1, window_bounds = array<i64: 32, 256>}, {pipeline_mode = #tpu.pipeline_mode<synchronous>, transform_indices = @transform_2, window_bounds = array<i64: 128, 128>}, {pipeline_mode = #tpu.pipeline_mode<synchronous>, transform_indices = @transform_3, window_bounds = array<i64: 8, 128>}, {transform_indices = @transform_4, window_bounds = array<i64: 128, 64>}]} {
    %0 = tpu.iota {dimensions = array<i32: 1>} : vector<1x128xi32>
    %c64_i32 = arith.constant 64 : i32
    %1 = vector.broadcast %c64_i32 : i32 to vector<1x128xi32>
    %2 = arith.cmpi slt, %0, %1 : vector<1x128xi32>
    %c0 = arith.constant 0 : index
    %c0_0 = arith.constant 0 : index
    %3 = vector.load %arg4[%c0, %c0_0] : memref<8x128xf32, #tpu.memory_space<vmem>>, vector<1x128xf32>
    %c1 = arith.constant 1 : index
    %c0_1 = arith.constant 0 : index
    %4 = vector.load %arg4[%c1, %c0_1] : memref<8x128xf32, #tpu.memory_space<vmem>>, vector<1x128xf32>
    %c2 = arith.constant 2 : index
    %c0_2 = arith.constant 0 : index
    %5 = vector.load %arg4[%c2, %c0_2] : memref<8x128xf32, #tpu.memory_space<vmem>>, vector<1x128xf32>
    %c3 = arith.constant 3 : index
    %c0_3 = arith.constant 0 : index
    %6 = vector.load %arg4[%c3, %c0_3] : memref<8x128xf32, #tpu.memory_space<vmem>>, vector<1x128xf32>
    %c4 = arith.constant 4 : index
    %c0_4 = arith.constant 0 : index
    %7 = vector.load %arg4[%c4, %c0_4] : memref<8x128xf32, #tpu.memory_space<vmem>>, vector<1x128xf32>
    %c5 = arith.constant 5 : index
    %c0_5 = arith.constant 0 : index
    %8 = vector.load %arg4[%c5, %c0_5] : memref<8x128xf32, #tpu.memory_space<vmem>>, vector<1x128xf32>
    %c6 = arith.constant 6 : index
    %c0_6 = arith.constant 0 : index
    %9 = vector.load %arg4[%c6, %c0_6] : memref<8x128xf32, #tpu.memory_space<vmem>>, vector<1x128xf32>
    %c0_7 = arith.constant 0 : index
    %c0_8 = arith.constant 0 : index
    %10 = vector.load %arg1[%c0_7, %c0_8] : memref<128x32xf32, #tpu.memory_space<vmem>>, vector<128x32xf32>
    %c0_9 = arith.constant 0 : index
    %c0_10 = arith.constant 0 : index
    %11 = vector.load %arg2[%c0_9, %c0_10] : memref<32x256xf32, #tpu.memory_space<vmem>>, vector<32x256xf32>
    %cst = arith.constant dense<0.000000e+00> : vector<128x256xf32>
    %12 = tpu.matmul %10, %11, %cst {dimension_numbers = #tpu.dot_dimension_numbers<[1], [0], [0], [1], [0, 0, 1, 1], [], []>} : vector<128x32xf32>, vector<32x256xf32>, vector<128x256xf32> -> vector<128x256xf32>
    %13 = vector.extract_strided_slice %12 {offsets = [0, 0], sizes = [128, 128], strides = [1, 1]} : vector<128x256xf32> to vector<128x128xf32>
    %14 = vector.broadcast %3 : vector<1x128xf32> to vector<128x128xf32>
    %15 = arith.addf %13, %14 : vector<128x128xf32>
    %16 = vector.extract_strided_slice %12 {offsets = [0, 128], sizes = [128, 128], strides = [1, 1]} : vector<128x256xf32> to vector<128x128xf32>
    %17 = vector.broadcast %9 : vector<1x128xf32> to vector<128x128xf32>
    %18 = arith.addf %16, %17 : vector<128x128xf32>
    %cst_11 = arith.constant dense<0.000000e+00> : vector<128xf32>
    %19 = vector.multi_reduction <add>, %15, %cst_11 [1] : vector<128x128xf32> to vector<128xf32>
    %20 = vector.shape_cast %19 : vector<128xf32> to vector<128x1xf32>
    %cst_12 = arith.constant 1.562500e-02 : f32
    %21 = vector.broadcast %cst_12 : f32 to vector<128x1xf32>
    %22 = arith.mulf %20, %21 : vector<128x1xf32>
    %23 = vector.broadcast %22 : vector<128x1xf32> to vector<128x128xf32>
    %24 = arith.subf %15, %23 : vector<128x128xf32>
    %cst_13 = arith.constant 0.000000e+00 : f32
    %25 = vector.shape_cast %2 : vector<1x128xi1> to vector<1x128xi1>
    %26 = vector.broadcast %25 : vector<1x128xi1> to vector<128x128xi1>
    %27 = vector.broadcast %cst_13 : f32 to vector<128x128xf32>
    %28 = arith.select %26, %24, %27 : vector<128x128xi1>, vector<128x128xf32>
    %29 = arith.mulf %28, %28 : vector<128x128xf32>
    %cst_14 = arith.constant dense<0.000000e+00> : vector<128xf32>
    %30 = vector.multi_reduction <add>, %29, %cst_14 [1] : vector<128x128xf32> to vector<128xf32>
    %31 = vector.shape_cast %30 : vector<128xf32> to vector<128x1xf32>
    %cst_15 = arith.constant 1.562500e-02 : f32
    %32 = vector.broadcast %cst_15 : f32 to vector<128x1xf32>
    %33 = arith.mulf %31, %32 : vector<128x1xf32>
    %cst_16 = arith.constant 9.99999974E-6 : f32
    %34 = vector.broadcast %cst_16 : f32 to vector<128x1xf32>
    %35 = arith.addf %33, %34 : vector<128x1xf32>
    %36 = math.rsqrt %35 : vector<128x1xf32>
    %37 = vector.broadcast %36 : vector<128x1xf32> to vector<128x128xf32>
    %38 = arith.mulf %28, %37 : vector<128x128xf32>
    %39 = vector.broadcast %4 : vector<1x128xf32> to vector<128x128xf32>
    %40 = arith.mulf %38, %39 : vector<128x128xf32>
    %41 = vector.broadcast %5 : vector<1x128xf32> to vector<128x128xf32>
    %42 = arith.addf %40, %41 : vector<128x128xf32>
    %cst_17 = arith.constant 0.000000e+00 : f32
    %43 = vector.broadcast %cst_17 : f32 to vector<128x128xf32>
    %44 = arith.maximumf %42, %43 : vector<128x128xf32>
    %c0_18 = arith.constant 0 : index
    %c0_19 = arith.constant 0 : index
    %45 = vector.load %arg3[%c0_18, %c0_19] : memref<128x128xf32, #tpu.memory_space<vmem>>, vector<128x128xf32>
    %cst_20 = arith.constant dense<0.000000e+00> : vector<128x128xf32>
    %46 = tpu.matmul %44, %45, %cst_20 {dimension_numbers = #tpu.dot_dimension_numbers<[1], [0], [0], [1], [0, 0, 1, 1], [], []>} : vector<128x128xf32>, vector<128x128xf32>, vector<128x128xf32> -> vector<128x128xf32>
    %47 = vector.broadcast %6 : vector<1x128xf32> to vector<128x128xf32>
    %48 = arith.addf %46, %47 : vector<128x128xf32>
    %cst_21 = arith.constant dense<0.000000e+00> : vector<128xf32>
    %49 = vector.multi_reduction <add>, %48, %cst_21 [1] : vector<128x128xf32> to vector<128xf32>
    %50 = vector.shape_cast %49 : vector<128xf32> to vector<128x1xf32>
    %cst_22 = arith.constant 1.562500e-02 : f32
    %51 = vector.broadcast %cst_22 : f32 to vector<128x1xf32>
    %52 = arith.mulf %50, %51 : vector<128x1xf32>
    %53 = vector.broadcast %52 : vector<128x1xf32> to vector<128x128xf32>
    %54 = arith.subf %48, %53 : vector<128x128xf32>
    %cst_23 = arith.constant 0.000000e+00 : f32
    %55 = vector.shape_cast %2 : vector<1x128xi1> to vector<1x128xi1>
    %56 = vector.broadcast %55 : vector<1x128xi1> to vector<128x128xi1>
    %57 = vector.broadcast %cst_23 : f32 to vector<128x128xf32>
    %58 = arith.select %56, %54, %57 : vector<128x128xi1>, vector<128x128xf32>
    %59 = arith.mulf %58, %58 : vector<128x128xf32>
    %cst_24 = arith.constant dense<0.000000e+00> : vector<128xf32>
    %60 = vector.multi_reduction <add>, %59, %cst_24 [1] : vector<128x128xf32> to vector<128xf32>
    %61 = vector.shape_cast %60 : vector<128xf32> to vector<128x1xf32>
    %cst_25 = arith.constant 1.562500e-02 : f32
    %62 = vector.broadcast %cst_25 : f32 to vector<128x1xf32>
    %63 = arith.mulf %61, %62 : vector<128x1xf32>
    %cst_26 = arith.constant 9.99999974E-6 : f32
    %64 = vector.broadcast %cst_26 : f32 to vector<128x1xf32>
    %65 = arith.addf %63, %64 : vector<128x1xf32>
    %66 = math.rsqrt %65 : vector<128x1xf32>
    %67 = vector.broadcast %66 : vector<128x1xf32> to vector<128x128xf32>
    %68 = arith.mulf %58, %67 : vector<128x128xf32>
    %69 = vector.broadcast %7 : vector<1x128xf32> to vector<128x128xf32>
    %70 = arith.mulf %68, %69 : vector<128x128xf32>
    %71 = vector.broadcast %8 : vector<1x128xf32> to vector<128x128xf32>
    %72 = arith.addf %70, %71 : vector<128x128xf32>
    %cst_27 = arith.constant 0.000000e+00 : f32
    %73 = vector.broadcast %cst_27 : f32 to vector<128x128xf32>
    %74 = arith.maximumf %72, %73 : vector<128x128xf32>
    %75 = arith.addf %74, %18 : vector<128x128xf32>
    %76 = vector.extract_strided_slice %75 {offsets = [0, 0], sizes = [128, 64], strides = [1, 1]} : vector<128x128xf32> to vector<128x64xf32>
    %c0_28 = arith.constant 0 : index
    %c0_29 = arith.constant 0 : index
    %77 = vector.load %arg5[%c0_28, %c0_29] : memref<128x64xf32, #tpu.memory_space<vmem>>, vector<128x64xf32>
    tpu.vector_store %arg5[%c0_28, %c0_29], %76 {strides = array<i32>} : memref<128x64xf32, #tpu.memory_space<vmem>>, vector<128x64xf32>,
    return
  }
  func.func @transform_0(%arg0: i32) -> (i32, i32) {
    %c0_i32 = arith.constant 0 : i32
    %c0_i32_0 = arith.constant 0 : i32
    return %arg0, %c0_i32 : i32, i32
  }
  func.func @transform_1(%arg0: i32) -> (i32, i32) {
    %c0_i32 = arith.constant 0 : i32
    %c0_i32_0 = arith.constant 0 : i32
    %c0_i32_1 = arith.constant 0 : i32
    return %c0_i32, %c0_i32_0 : i32, i32
  }
  func.func @transform_2(%arg0: i32) -> (i32, i32) {
    %c0_i32 = arith.constant 0 : i32
    %c0_i32_0 = arith.constant 0 : i32
    %c0_i32_1 = arith.constant 0 : i32
    return %c0_i32, %c0_i32_0 : i32, i32
  }
  func.func @transform_3(%arg0: i32) -> (i32, i32) {
    %c0_i32 = arith.constant 0 : i32
    %c0_i32_0 = arith.constant 0 : i32
    %c0_i32_1 = arith.constant 0 : i32
    return %c0_i32, %c0_i32_0 : i32, i32
  }
  func.func @transform_4(%arg0: i32) -> (i32, i32) {
    %c0_i32 = arith.constant 0 : i32
    %c0_i32_0 = arith.constant 0 : i32
    return %arg0, %c0_i32 : i32, i32
  }
}

</mosaic_0001>

<llo_original>
// kernel: tpu_custom_call.1
$region0: #{tpu_custom_call.1}
  #allocation0 [shape = 'u32[]', space=smem, size = 0x4, offset = 0x4, fixed_abs, tag = 'smem constant byte address 0x4 - core index']
  #allocation1 [shape = 'u32[144,128]{1,0:T(1,128)}', space=vmem, size = 0x12000, scoped, tag = 'internal scratch']
  %s0 = inlined_call_operand.vmem [shape: f32[256,32], index: 0, kind: input, shape index: {}]
  %s1 = inlined_call_operand.vmem [shape: f32[32,256], index: 1, kind: input, shape index: {}]
  %s2 = inlined_call_operand.vmem [shape: f32[128,128], index: 2, kind: input, shape index: {}]
  %s3 = inlined_call_operand.vmem [shape: f32[8,128], index: 3, kind: input, shape index: {}]
  %s4 = inlined_call_operand.vmem [shape: f32[256,64], index: 4, kind: output, shape index: {}]
  %s5 = sld [smem:[#allocation0]]
  $region49: #{tpu_custom_call.1} parent=0
    _
  %s7 = ssub.s32 1, %s5
  %s8 = scalar_select 0, %s7, %s5
  loop: start=0, step=1, limit=4
  $region2: #{tpu_custom_call.1} parent=0 // loop_pre_header
    _
  $region3: #{tpu_custom_call.1} parent=0 // loop_header
    %s10 = sphi 0, %s14
    %p11 = scmp.ge.s32.totalorder %s10, 4
    %s20 = sphi 0, %s22
    %s23 = sphi 0, %s20
    %s24 = sphi 0, %s23
    %s40 = sphi 0, %s24
    %s44 = sphi 0, %s44
    %s46 = sphi 0, %s44
    %s47 = sphi 0, %s46
    %s61 = sphi 0, %s47
    %s65 = sphi 0, %s65
    %s67 = sphi 0, %s65
    %s68 = sphi 0, %s67
    %s82 = sphi 0, %s68
    %s86 = sphi 0, %s86
    %s88 = sphi 0, %s86
    %s89 = sphi 0, %s88
    %s103 = sphi 0, %s89
    %s109 = sphi 0, %s111
    %s112 = sphi 0, %s109
    %s113 = sphi 0, %s112
    %s129 = sphi 0, %s113
  $region4: #{tpu_custom_call.1} parent=0 // loop_header_branch
    %13 = sbr.rel (%p11) target = $region8
  $region5: #{tpu_custom_call.1} parent=0 // loop_body
    %s15 = ssub.s32 %s10, 1
    %s16 = ssub.s32 %s10, 2
    %s17 = sadd.s32 %s10, 1
    %s18 = ssub.s32 %s10, %s17
    %p19 = scmp.eq.s32.totalorder %s18, 0
    %s21 = sadd.s32 %s20, 1
    %s22 = scalar_select %p19, %s20, %s21
    %p25 = pneg %p19
    %p26 = scmp.eq.s32.totalorder %s10, 1
    %p27 = por %p25, %p26
    %p28 = scmp.ne.s32.totalorder %s20, %s23
    %p29 = scmp.eq.s32.totalorder %s10, 0
    %p30 = por %p28, %p29
    %p31 = scmp.ne.s32.totalorder %s20, %s23
    %p32 = scmp.eq.s32.totalorder %s15, 1
    %p33 = por %p31, %p32
    %p34 = scmp.ne.s32.totalorder %s23, %s24
    %p35 = scmp.eq.s32.totalorder %s15, 0
    %p36 = por %p34, %p35
    %p37 = scmp.ne.s32.totalorder %s23, %s24
    %p38 = scmp.eq.s32.totalorder %s16, 1
    %p39 = por %p37, %p38
    %p41 = scmp.ne.s32.totalorder %s24, %s40
    %p42 = scmp.eq.s32.totalorder %s16, 0
    %p43 = por %p41, %p42
    %s45 = sadd.s32 %s44, 1
    %p48 = scmp.eq.s32.totalorder %s10, 1
    %p49 = scmp.ne.s32.totalorder %s44, %s46
    %p50 = scmp.eq.s32.totalorder %s10, 0
    %p51 = por %p49, %p50
    %p52 = scmp.ne.s32.totalorder %s44, %s46
    %p53 = scmp.eq.s32.totalorder %s15, 1
    %p54 = por %p52, %p53
    %p55 = scmp.ne.s32.totalorder %s46, %s47
    %p56 = scmp.eq.s32.totalorder %s15, 0
    %p57 = por %p55, %p56
    %p58 = scmp.ne.s32.totalorder %s46, %s47
    %p59 = scmp.eq.s32.totalorder %s16, 1
    %p60 = por %p58, %p59
    %p62 = scmp.ne.s32.totalorder %s47, %s61
    %p63 = scmp.eq.s32.totalorder %s16, 0
    %p64 = por %p62, %p63
    %s66 = sadd.s32 %s65, 1
    %p69 = scmp.eq.s32.totalorder %s10, 1
    %p70 = scmp.ne.s32.totalorder %s65, %s67
    %p71 = scmp.eq.s32.totalorder %s10, 0
    %p72 = por %p70, %p71
    %p73 = scmp.ne.s32.totalorder %s65, %s67
    %p74 = scmp.eq.s32.totalorder %s15, 1
    %p75 = por %p73, %p74
    %p76 = scmp.ne.s32.totalorder %s67, %s68
    %p77 = scmp.eq.s32.totalorder %s15, 0
    %p78 = por %p76, %p77
    %p79 = scmp.ne.s32.totalorder %s67, %s68
    %p80 = scmp.eq.s32.totalorder %s16, 1
    %p81 = por %p79, %p80
    %p83 = scmp.ne.s32.totalorder %s68, %s82
    %p84 = scmp.eq.s32.totalorder %s16, 0
    %p85 = por %p83, %p84
    %s87 = sadd.s32 %s86, 1
    %p90 = scmp.eq.s32.totalorder %s10, 1
    %p91 = scmp.ne.s32.totalorder %s86, %s88
    %p92 = scmp.eq.s32.totalorder %s10, 0
    %p93 = por %p91, %p92
    %p94 = scmp.ne.s32.totalorder %s86, %s88
    %p95 = scmp.eq.s32.totalorder %s15, 1
    %p96 = por %p94, %p95
    %p97 = scmp.ne.s32.totalorder %s88, %s89
    %p98 = scmp.eq.s32.totalorder %s15, 0
    %p99 = por %p97, %p98
    %p100 = scmp.ne.s32.totalorder %s88, %s89
    %p101 = scmp.eq.s32.totalorder %s16, 1
    %p102 = por %p100, %p101
    %p104 = scmp.ne.s32.totalorder %s89, %s103
    %p105 = scmp.eq.s32.totalorder %s16, 0
    %p106 = por %p104, %p105
    %s107 = ssub.s32 %s10, %s17
    %p108 = scmp.eq.s32.totalorder %s107, 0
    %s110 = sadd.s32 %s109, 1
    %s111 = scalar_select %p108, %s109, %s110
    %p114 = pneg %p108
    %p115 = scmp.eq.s32.totalorder %s10, 1
    %p116 = por %p114, %p115
    %p117 = scmp.ne.s32.totalorder %s109, %s112
    %p118 = scmp.eq.s32.totalorder %s10, 0
    %p119 = por %p117, %p118
    %p120 = scmp.ne.s32.totalorder %s109, %s112
    %p121 = scmp.eq.s32.totalorder %s15, 1
    %p122 = por %p120, %p121
    %p123 = scmp.ne.s32.totalorder %s112, %s113
    %p124 = scmp.eq.s32.totalorder %s15, 0
    %p125 = por %p123, %p124
    %p126 = scmp.ne.s32.totalorder %s112, %s113
    %p127 = scmp.eq.s32.totalorder %s16, 1
    %p128 = por %p126, %p127
    %p130 = scmp.ne.s32.totalorder %s113, %s129
    %p131 = scmp.eq.s32.totalorder %s16, 0
    %p132 = por %p130, %p131
    %p133 = scmp.le.s32.totalorder 1, %s10
    %p134 = scmp.lt.s32.totalorder %s10, 3
    %p135 = pnand %p133, %p134
    %p136 = pneg %p135
    // Predicated region
    $region9: #{tpu_custom_call.1} parent=5 // pred_check
      _
    $region10: #{tpu_custom_call.1} parent=5 // pred_check_branch
      %138 = sbr.rel (%p135) target = $region12
    $region11: #{tpu_custom_call.1} parent=5 // pred_region
      %s139 = ssub.s32 %s10, 1
      // Predicated region
      $region13: #{tpu_custom_call.1} parent=11 // pred_check
        %p140 = pneg %p57
      $region14: #{tpu_custom_call.1} parent=11 // pred_check_branch
        %142 = sbr.rel (%p140) target = $region16
      $region15: #{tpu_custom_call.1} parent=11 // pred_region
        _
      $region16: #{tpu_custom_call.1} parent=11 // pred_fallthru
        _
      // Predicated region
      $region17: #{tpu_custom_call.1} parent=11 // pred_check
        %p143 = pneg %p78
      $region18: #{tpu_custom_call.1} parent=11 // pred_check_branch
        %145 = sbr.rel (%p143) target = $region20
      $region19: #{tpu_custom_call.1} parent=11 // pred_region
        _
      $region20: #{tpu_custom_call.1} parent=11 // pred_fallthru
        _
      // Predicated region
      $region21: #{tpu_custom_call.1} parent=11 // pred_check
        %p146 = pneg %p99
      $region22: #{tpu_custom_call.1} parent=11 // pred_check_branch
        %148 = sbr.rel (%p146) target = $region24
      $region23: #{tpu_custom_call.1} parent=11 // pred_region
        _
      $region24: #{tpu_custom_call.1} parent=11 // pred_fallthru
        _
    $region12: #{tpu_custom_call.1} parent=5 // pred_fallthru
      _
    %p149 = scmp.lt.s32.totalorder %s10, 2
    // Predicated region
    $region25: #{tpu_custom_call.1} parent=5 // pred_check
      %p150 = pneg %p149
    $region26: #{tpu_custom_call.1} parent=5 // pred_check_branch
      %152 = sbr.rel (%p150) target = $region28
    $region27: #{tpu_custom_call.1} parent=5 // pred_region
      // Predicated region
      $region29: #{tpu_custom_call.1} parent=27 // pred_check
        %p153 = pneg %p30
      $region30: #{tpu_custom_call.1} parent=27 // pred_check_branch
        %155 = sbr.rel (%p153) target = $region32
      $region31: #{tpu_custom_call.1} parent=27 // pred_region
        %s156 = smul.u32 16, %s10
        %p157 = scmp.lt.s32.totalorder %s156, 31
        %s158 = scalar_select %p157, %s156, 31
        %s159 = smul.addr %s158, 8
        %s160 = scalar_lea.vmem %s0, %s159
        %s161 = smul.u32 16, %s10
      $region32: #{tpu_custom_call.1} parent=27 // pred_fallthru
        _
    $region28: #{tpu_custom_call.1} parent=5 // pred_fallthru
      _
    %p162 = scmp.le.s32.totalorder 1, %s10
    %p163 = scmp.lt.s32.totalorder %s10, 3
    %p164 = pnand %p162, %p163
    %p165 = pneg %p164
    // Predicated region
    $region33: #{tpu_custom_call.1} parent=5 // pred_check
      _
    $region34: #{tpu_custom_call.1} parent=5 // pred_check_branch
      %167 = sbr.rel (%p164) target = $region36
    $region35: #{tpu_custom_call.1} parent=5 // pred_region
      %s168 = ssub.s32 %s10, 1
      %s169 = smul.u32 16, %s15
      %p170 = scmp.lt.s32.totalorder %s169, 31
      %s171 = scalar_select %p170, %s169, 31
      %s172 = smul.addr %s171, 8
      %s173 = scalar_lea.vmem %s0, %s172
      %p174 = pneg %p36
      %p175 = pneg %p33
      %p176 = pneg %p57
      %p177 = pneg %p54
      %p178 = pneg %p78
      %p179 = pneg %p75
      %p180 = pneg %p99
      %p181 = pneg %p96
      %p182 = pneg %p125
      %p183 = pneg %p122
      %s184 = smul.u32 16, %s15
      %p185 = scmp.lt.s32.totalorder %s184, 31
      %s186 = scalar_select %p185, %s184, 31
      %s187 = smul.addr %s186, 8
      %s188 = scalar_lea.vmem %s4, %s187
      %s189 = smul.u32 16, %s15
      %p190 = scmp.lt.s32.totalorder %s189, 31
      %s191 = scalar_select %p190, %s189, 31
      %s192 = smul.addr %s191, 8
      %s193 = scalar_lea.vmem %s0, %s192
      %s194 = smul.u32 16, %s15
      %s195 = smul.u32 16, %s15
      %p196 = scmp.lt.s32.totalorder %s195, 31
      %s197 = scalar_select %p196, %s195, 31
      %s198 = smul.addr %s197, 8
      %s199 = scalar_lea.vmem %s4, %s198
      %s200 = smul.u32 16, %s15
      %v201 = vlaneseq
      %v202 = vand.u32 %v201, 127
      %vm203 = vcmp.lt.s32.totalorder %v202, 64
      %v204 = vld [vmem:[%s3] sm:$0x1]
      %v205 = vld [vmem:[%s3 + $0x1] sm:$0x1]
      %v206 = vld [vmem:[%s3 + $0x2] sm:$0x1]
      %v207 = vld [vmem:[%s3 + $0x3] sm:$0x1]
      %v208 = vld [vmem:[%s3 + $0x4] sm:$0x1]
      %v209 = vld [vmem:[%s3 + $0x5] sm:$0x1]
      %v210 = vld [vmem:[%s3 + $0x6] sm:$0x1]
      %v211 = vld [vmem:[%s193] sm:$0xff]
      %v212 = vld [vmem:[%s193 + $0x8] sm:$0xff]
      %v213 = vld [vmem:[%s193 + $0x10] sm:$0xff]
      %v214 = vld [vmem:[%s193 + $0x18] sm:$0xff]
      %v215 = vld [vmem:[%s193 + $0x20] sm:$0xff]
      %v216 = vld [vmem:[%s193 + $0x28] sm:$0xff]
      %v217 = vld [vmem:[%s193 + $0x30] sm:$0xff]
      %v218 = vld [vmem:[%s193 + $0x38] sm:$0xff]
      %v219 = vld [vmem:[%s193 + $0x40] sm:$0xff]
      %v220 = vld [vmem:[%s193 + $0x48] sm:$0xff]
      %v221 = vld [vmem:[%s193 + $0x50] sm:$0xff]
      %v222 = vld [vmem:[%s193 + $0x58] sm:$0xff]
      %v223 = vld [vmem:[%s193 + $0x60] sm:$0xff]
      %v224 = vld [vmem:[%s193 + $0x68] sm:$0xff]
      %v225 = vld [vmem:[%s193 + $0x70] sm:$0xff]
      %v226 = vld [vmem:[%s193 + $0x78] sm:$0xff]
      %v227 = vld [vmem:[%s1] sm:$0xff]
      %v228 = vld [vmem:[%s1 + $0x8] sm:$0xff]
      %v229 = vld [vmem:[%s1 + $0x10] sm:$0xff]
      %v230 = vld [vmem:[%s1 + $0x18] sm:$0xff]
      %v231 = vld [vmem:[%s1 + $0x20] sm:$0xff]
      %v232 = vld [vmem:[%s1 + $0x28] sm:$0xff]
      %v233 = vld [vmem:[%s1 + $0x30] sm:$0xff]
      %v234 = vld [vmem:[%s1 + $0x38] sm:$0xff]
      %vm235 = vcmask 261120
      %v237 = vsel %vm235, %v211, 0
      %v240 = vsel %vm235, %v212, 0
      %v243 = vsel %vm235, %v213, 0
      %v246 = vsel %vm235, %v214, 0
      %v249 = vsel %vm235, %v215, 0
      %v252 = vsel %vm235, %v216, 0
      %v255 = vsel %vm235, %v217, 0
      %v258 = vsel %vm235, %v218, 0
      %v261 = vsel %vm235, %v219, 0
      %v264 = vsel %vm235, %v220, 0
      %v267 = vsel %vm235, %v221, 0
      %v270 = vsel %vm235, %v222, 0
      %v273 = vsel %vm235, %v223, 0
      %v276 = vsel %vm235, %v224, 0
      %v279 = vsel %vm235, %v225, 0
      %v282 = vsel %vm235, %v226, 0
      %284 = vmatprep.subr.mxu0 %v228
      %285 = vmatpush1.msra.mxu0 %v227
      %286 = vmatprep.subr.mxu0 %v230
      %287 = vmatpush1.msra.mxu0 %v229
      %288 = vmatprep.subr.mxu0 %v232
      %289 = vmatpush1.msra.mxu0 %v231
      %290 = vmatprep.subr.mxu0 %v234
      %291 = vmatpush1.msra.mxu0 %v233
      %292 = vmatprep.subr.mxu0 0.0
      %293 = vmatpush1.msra.mxu0 0.0
      %294 = vmatprep.subr.mxu0 0.0
      %295 = vmatpush1.msra.mxu0 0.0
      %296 = vmatprep.subr.mxu0 0.0
      %297 = vmatpush1.msra.mxu0 0.0
      %298 = vmatprep.subr.mxu0 0.0
      %299 = vmatpush1.msra.mxu0 0.0
      %300 = vmatprep.subr.mxu0 0.0
      %301 = vmatpush1.msra.mxu0 0.0
      %302 = vmatprep.subr.mxu0 0.0
      %303 = vmatpush1.msra.mxu0 0.0
      %304 = vmatprep.subr.mxu0 0.0
      %305 = vmatpush1.msra.mxu0 0.0
      %306 = vmatprep.subr.mxu0 0.0
      %307 = vmatpush1.msra.mxu0 0.0
      %308 = vmatprep.subr.mxu0 0.0
      %309 = vmatpush1.msra.mxu0 0.0
      %310 = vmatprep.subr.mxu0 0.0
      %311 = vmatpush1.msra.mxu0 0.0
      %312 = vmatprep.subr.mxu0 0.0
      %313 = vmatpush1.msra.mxu0 0.0
      %314 = vmatprep.subr.mxu0 0.0
      %315 = vmatpush1.msra.mxu0 0.0
      %316 = vmatprep.subr.mxu0 0.0
      %317 = vmatpush1.msra.mxu0 0.0
      %318 = vmatprep.subr.mxu0 0.0
      %319 = vmatpush1.msra.mxu0 0.0
      %320 = vmatprep.subr.mxu0 0.0
      %321 = vmatpush1.msra.mxu0 0.0
      %322 = vmatprep.subr.mxu0 0.0
      %323 = vmatpush1.msra.mxu0 0.0
      %324 = vmatprep.subr.mxu0 0.0
      %325 = vmatpush1.msra.mxu0 0.0
      %326 = vmatprep.subr.mxu0 0.0
      %327 = vmatpush1.msra.mxu0 0.0
      %328 = vmatprep.subr.mxu0 0.0
      %329 = vmatpush1.msra.mxu0 0.0
      %330 = vmatprep.subr.mxu0 0.0
      %331 = vmatpush1.msra.mxu0 0.0
      %332 = vmatprep.subr.mxu0 0.0
      %333 = vmatpush1.msra.mxu0 0.0
      %334 = vmatprep.subr.mxu0 0.0
      %335 = vmatpush1.msra.mxu0 0.0
      %336 = vmatprep.subr.mxu0 0.0
      %337 = vmatpush1.msra.mxu0 0.0
      %338 = vmatprep.subr.mxu0 0.0
      %339 = vmatpush1.msra.mxu0 0.0
      %340 = vmatprep.subr.mxu0 0.0
      %341 = vmatpush1.msra.mxu0 0.0
      %342 = vmatprep.subr.mxu0 0.0
      %343 = vmatpush1.msra.mxu0 0.0
      %344 = vmatprep.subr.mxu0 0.0
      %345 = vmatpush1.msra.mxu0 0.0
      %346 = vmatprep.subr.mxu0 0.0
      %347 = vmatpush1.msra.mxu0 0.0
      %348 = vmatprep.mubr.f32.mxu0 0.0
      %349 = vmatmul.mubr.f32.gmra.mrb[0].mxu0 %v237
      %v350 = vpop.f32.mrb[0].mxu0
      %v351 = vadd.f32 0.0, %v350
      %v352 = vpop.f32.mrb[0].mxu0
      %v353 = vadd.f32 0.0, %v352
      %354 = vmatprep.mubr.f32.mxu0 0.0
      %355 = vmatmul.mubr.f32.gmra.mrb[0].mxu0 %v240
      %v356 = vpop.f32.mrb[0].mxu0
      %v357 = vadd.f32 0.0, %v356
      %v358 = vpop.f32.mrb[0].mxu0
      %v359 = vadd.f32 0.0, %v358
      %360 = vmatprep.mubr.f32.mxu0 0.0
      %361 = vmatmul.mubr.f32.gmra.mrb[0].mxu0 %v243
      %v362 = vpop.f32.mrb[0].mxu0
      %v363 = vadd.f32 0.0, %v362
      %v364 = vpop.f32.mrb[0].mxu0
      %v365 = vadd.f32 0.0, %v364
      %366 = vmatprep.mubr.f32.mxu0 0.0
      %367 = vmatmul.mubr.f32.gmra.mrb[0].mxu0 %v246
      %v368 = vpop.f32.mrb[0].mxu0
      %v369 = vadd.f32 0.0, %v368
      %v370 = vpop.f32.mrb[0].mxu0
      %v371 = vadd.f32 0.0, %v370
      %372 = vmatprep.mubr.f32.mxu0 0.0
      %373 = vmatmul.mubr.f32.gmra.mrb[0].mxu0 %v249
      %v374 = vpop.f32.mrb[0].mxu0
      %v375 = vadd.f32 0.0, %v374
      %v376 = vpop.f32.mrb[0].mxu0
      %v377 = vadd.f32 0.0, %v376
      %378 = vmatprep.mubr.f32.mxu0 0.0
      %379 = vmatmul.mubr.f32.gmra.mrb[0].mxu0 %v252
      %v380 = vpop.f32.mrb[0].mxu0
      %v381 = vadd.f32 0.0, %v380
      %v382 = vpop.f32.mrb[0].mxu0
      %v383 = vadd.f32 0.0, %v382
      %384 = vmatprep.mubr.f32.mxu0 0.0
      %385 = vmatmul.mubr.f32.gmra.mrb[0].mxu0 %v255
      %v386 = vpop.f32.mrb[0].mxu0
      %v387 = vadd.f32 0.0, %v386
      %v388 = vpop.f32.mrb[0].mxu0
      %v389 = vadd.f32 0.0, %v388
      %390 = vmatprep.mubr.f32.mxu0 0.0
      %391 = vmatmul.mubr.f32.gmra.mrb[0].mxu0 %v258
      %v392 = vpop.f32.mrb[0].mxu0
      %v393 = vadd.f32 0.0, %v392
      %v394 = vpop.f32.mrb[0].mxu0
      %v395 = vadd.f32 0.0, %v394
      %396 = vmatprep.mubr.f32.mxu0 0.0
      %397 = vmatmul.mubr.f32.gmra.mrb[0].mxu0 %v261
      %v398 = vpop.f32.mrb[0].mxu0
      %v399 = vadd.f32 0.0, %v398
      %v400 = vpop.f32.mrb[0].mxu0
      %v401 = vadd.f32 0.0, %v400
      %402 = vmatprep.mubr.f32.mxu0 0.0
      %403 = vmatmul.mubr.f32.gmra.mrb[0].mxu0 %v264
      %v404 = vpop.f32.mrb[0].mxu0
      %v405 = vadd.f32 0.0, %v404
      %v406 = vpop.f32.mrb[0].mxu0
      %v407 = vadd.f32 0.0, %v406
      %408 = vmatprep.mubr.f32.mxu0 0.0
      %409 = vmatmul.mubr.f32.gmra.mrb[0].mxu0 %v267
      %v410 = vpop.f32.mrb[0].mxu0
      %v411 = vadd.f32 0.0, %v410
      %v412 = vpop.f32.mrb[0].mxu0
      %v413 = vadd.f32 0.0, %v412
      %414 = vmatprep.mubr.f32.mxu0 0.0
      %415 = vmatmul.mubr.f32.gmra.mrb[0].mxu0 %v270
      %v416 = vpop.f32.mrb[0].mxu0
      %v417 = vadd.f32 0.0, %v416
      %v418 = vpop.f32.mrb[0].mxu0
      %v419 = vadd.f32 0.0, %v418
      %420 = vmatprep.mubr.f32.mxu0 0.0
      %421 = vmatmul.mubr.f32.gmra.mrb[0].mxu0 %v273
      %v422 = vpop.f32.mrb[0].mxu0
      %v423 = vadd.f32 0.0, %v422
      %v424 = vpop.f32.mrb[0].mxu0
      %v425 = vadd.f32 0.0, %v424
      %426 = vmatprep.mubr.f32.mxu0 0.0
      %427 = vmatmul.mubr.f32.gmra.mrb[0].mxu0 %v276
      %v428 = vpop.f32.mrb[0].mxu0
      %v429 = vadd.f32 0.0, %v428
      %v430 = vpop.f32.mrb[0].mxu0
      %v431 = vadd.f32 0.0, %v430
      %432 = vmatprep.mubr.f32.mxu0 0.0
      %433 = vmatmul.mubr.f32.gmra.mrb[0].mxu0 %v279
      %v434 = vpop.f32.mrb[0].mxu0
      %v435 = vadd.f32 0.0, %v434
      %v436 = vpop.f32.mrb[0].mxu0
      %v437 = vadd.f32 0.0, %v436
      %438 = vmatprep.mubr.f32.mxu0 0.0
      %439 = vmatmul.mubr.f32.gmra.mrb[0].mxu0 %v282
      %v440 = vpop.f32.mrb[0].mxu0
      %v441 = vadd.f32 0.0, %v440
      %v442 = vpop.f32.mrb[0].mxu0
      %v443 = vadd.f32 0.0, %v442
      %444 = vdwg.mxu0
      %v445 = vlaneseq
      %v446 = vshrl.u32 %v445, 7
      %v447 = vsub.s32 0, %v446
      %v448 = vrot.slane %v204, %v447
      %v449 = vadd.f32 %v351, %v448
      %v450 = vadd.f32 %v357, %v448
      %v451 = vadd.f32 %v363, %v448
      %v452 = vadd.f32 %v369, %v448
      %v453 = vadd.f32 %v375, %v448
      %v454 = vadd.f32 %v381, %v448
      %v455 = vadd.f32 %v387, %v448
      %v456 = vadd.f32 %v393, %v448
      %v457 = vadd.f32 %v399, %v448
      %v458 = vadd.f32 %v405, %v448
      %v459 = vadd.f32 %v411, %v448
      %v460 = vadd.f32 %v417, %v448
      %v461 = vadd.f32 %v423, %v448
      %v462 = vadd.f32 %v429, %v448
      %v463 = vadd.f32 %v435, %v448
      %v464 = vadd.f32 %v441, %v448
      %v465 = vlaneseq
      %v466 = vshrl.u32 %v465, 7
      %v467 = vsub.s32 0, %v466
      %v468 = vrot.slane %v210, %v467
      %v469 = vadd.f32 %v353, %v468
      %v470 = vadd.f32 %v359, %v468
      %v471 = vadd.f32 %v365, %v468
      %v472 = vadd.f32 %v371, %v468
      %v473 = vadd.f32 %v377, %v468
      %v474 = vadd.f32 %v383, %v468
      %v475 = vadd.f32 %v389, %v468
      %v476 = vadd.f32 %v395, %v468
      %v477 = vadd.f32 %v401, %v468
      %v478 = vadd.f32 %v407, %v468
      %v479 = vadd.f32 %v413, %v468
      %v480 = vadd.f32 %v419, %v468
      %v481 = vadd.f32 %v425, %v468
      %v482 = vadd.f32 %v431, %v468
      %v483 = vadd.f32 %v437, %v468
      %v484 = vadd.f32 %v443, %v468
      %485 = vadd.xlane.f32.xlu0 %v449
      %v486 = vpop.xlane.xlu0 %485
      %487 = vadd.xlane.f32.xlu0 %v450
      %v488 = vpop.xlane.xlu0 %487
      %489 = vadd.xlane.f32.xlu0 %v451
      %v490 = vpop.xlane.xlu0 %489
      %491 = vadd.xlane.f32.xlu0 %v452
      %v492 = vpop.xlane.xlu0 %491
      %493 = vadd.xlane.f32.xlu0 %v453
      %v494 = vpop.xlane.xlu0 %493
      %495 = vadd.xlane.f32.xlu0 %v454
      %v496 = vpop.xlane.xlu0 %495
      %497 = vadd.xlane.f32.xlu0 %v455
      %v498 = vpop.xlane.xlu0 %497
      %499 = vadd.xlane.f32.xlu0 %v456
      %v500 = vpop.xlane.xlu0 %499
      %501 = vadd.xlane.f32.xlu0 %v457
      %v502 = vpop.xlane.xlu0 %501
      %503 = vadd.xlane.f32.xlu0 %v458
      %v504 = vpop.xlane.xlu0 %503
      %505 = vadd.xlane.f32.xlu0 %v459
      %v506 = vpop.xlane.xlu0 %505
      %507 = vadd.xlane.f32.xlu0 %v460
      %v508 = vpop.xlane.xlu0 %507
      %509 = vadd.xlane.f32.xlu0 %v461
      %v510 = vpop.xlane.xlu0 %509
      %511 = vadd.xlane.f32.xlu0 %v462
      %v512 = vpop.xlane.xlu0 %511
      %513 = vadd.xlane.f32.xlu0 %v463
      %v514 = vpop.xlane.xlu0 %513
      %515 = vadd.xlane.f32.xlu0 %v464
      %v516 = vpop.xlane.xlu0 %515
      %v517 = vmul.f32 %v486, 0.015625
      %v518 = vmul.f32 %v488, 0.015625
      %v519 = vmul.f32 %v490, 0.015625
      %v520 = vmul.f32 %v492, 0.015625
      %v521 = vmul.f32 %v494, 0.015625
      %v522 = vmul.f32 %v496, 0.015625
      %v523 = vmul.f32 %v498, 0.015625
      %v524 = vmul.f32 %v500, 0.015625
      %v525 = vmul.f32 %v502, 0.015625
      %v526 = vmul.f32 %v504, 0.015625
      %v527 = vmul.f32 %v506, 0.015625
      %v528 = vmul.f32 %v508, 0.015625
      %v529 = vmul.f32 %v510, 0.015625
      %v530 = vmul.f32 %v512, 0.015625
      %v531 = vmul.f32 %v514, 0.015625
      %v532 = vmul.f32 %v516, 0.015625
      %v533 = vsub.f32 %v449, %v517
      %v534 = vsub.f32 %v450, %v518
      %v535 = vsub.f32 %v451, %v519
      %v536 = vsub.f32 %v452, %v520
      %v537 = vsub.f32 %v453, %v521
      %v538 = vsub.f32 %v454, %v522
      %v539 = vsub.f32 %v455, %v523
      %v540 = vsub.f32 %v456, %v524
      %v541 = vsub.f32 %v457, %v525
      %v542 = vsub.f32 %v458, %v526
      %v543 = vsub.f32 %v459, %v527
      %v544 = vsub.f32 %v460, %v528
      %v545 = vsub.f32 %v461, %v529
      %v546 = vsub.f32 %v462, %v530
      %v547 = vsub.f32 %v463, %v531
      %v548 = vsub.f32 %v464, %v532
      %v549 = vsel %vm203, 1, 0
      %vm550 = vcmp.eq.s32.totalorder %v549, 1
      %v551 = vsel %vm550, %v533, 0.0
      %v552 = vsel %vm550, %v534, 0.0
      %v553 = vsel %vm550, %v535, 0.0
      %v554 = vsel %vm550, %v536, 0.0
      %v555 = vsel %vm550, %v537, 0.0
      %v556 = vsel %vm550, %v538, 0.0
      %v557 = vsel %vm550, %v539, 0.0
      %v558 = vsel %vm550, %v540, 0.0
      %v559 = vsel %vm550, %v541, 0.0
      %v560 = vsel %vm550, %v542, 0.0
      %v561 = vsel %vm550, %v543, 0.0
      %v562 = vsel %vm550, %v544, 0.0
      %v563 = vsel %vm550, %v545, 0.0
      %v564 = vsel %vm550, %v546, 0.0
      %v565 = vsel %vm550, %v547, 0.0
      %v566 = vsel %vm550, %v548, 0.0
      %v567 = vmul.f32 %v551, %v551
      %v568 = vmul.f32 %v552, %v552
      %v569 = vmul.f32 %v553, %v553
      %v570 = vmul.f32 %v554, %v554
      %v571 = vmul.f32 %v555, %v555
      %v572 = vmul.f32 %v556, %v556
      %v573 = vmul.f32 %v557, %v557
      %v574 = vmul.f32 %v558, %v558
      %v575 = vmul.f32 %v559, %v559
      %v576 = vmul.f32 %v560, %v560
      %v577 = vmul.f32 %v561, %v561
      %v578 = vmul.f32 %v562, %v562
      %v579 = vmul.f32 %v563, %v563
      %v580 = vmul.f32 %v564, %v564
      %v581 = vmul.f32 %v565, %v565
      %v582 = vmul.f32 %v566, %v566
      %583 = vadd.xlane.f32.xlu0 %v567
      %v584 = vpop.xlane.xlu0 %583
      %585 = vadd.xlane.f32.xlu0 %v568
      %v586 = vpop.xlane.xlu0 %585
      %587 = vadd.xlane.f32.xlu0 %v569
      %v588 = vpop.xlane.xlu0 %587
      %589 = vadd.xlane.f32.xlu0 %v570
      %v590 = vpop.xlane.xlu0 %589
      %591 = vadd.xlane.f32.xlu0 %v571
      %v592 = vpop.xlane.xlu0 %591
      %593 = vadd.xlane.f32.xlu0 %v572
      %v594 = vpop.xlane.xlu0 %593
      %595 = vadd.xlane.f32.xlu0 %v573
      %v596 = vpop.xlane.xlu0 %595
      %597 = vadd.xlane.f32.xlu0 %v574
      %v598 = vpop.xlane.xlu0 %597
      %599 = vadd.xlane.f32.xlu0 %v575
      %v600 = vpop.xlane.xlu0 %599
      %601 = vadd.xlane.f32.xlu0 %v576
      %v602 = vpop.xlane.xlu0 %601
      %603 = vadd.xlane.f32.xlu0 %v577
      %v604 = vpop.xlane.xlu0 %603
      %605 = vadd.xlane.f32.xlu0 %v578
      %v606 = vpop.xlane.xlu0 %605
      %607 = vadd.xlane.f32.xlu0 %v579
      %v608 = vpop.xlane.xlu0 %607
      %609 = vadd.xlane.f32.xlu0 %v580
      %v610 = vpop.xlane.xlu0 %609
      %611 = vadd.xlane.f32.xlu0 %v581
      %v612 = vpop.xlane.xlu0 %611
      %613 = vadd.xlane.f32.xlu0 %v582
      %v614 = vpop.xlane.xlu0 %613
      %v615 = vmul.f32 %v584, 0.015625
      %v616 = vmul.f32 %v586, 0.015625
      %v617 = vmul.f32 %v588, 0.015625
      %v618 = vmul.f32 %v590, 0.015625
      %v619 = vmul.f32 %v592, 0.015625
      %v620 = vmul.f32 %v594, 0.015625
      %v621 = vmul.f32 %v596, 0.015625
      %v622 = vmul.f32 %v598, 0.015625
      %v623 = vmul.f32 %v600, 0.015625
      %v624 = vmul.f32 %v602, 0.015625
      %v625 = vmul.f32 %v604, 0.015625
      %v626 = vmul.f32 %v606, 0.015625
      %v627 = vmul.f32 %v608, 0.015625
      %v628 = vmul.f32 %v610, 0.015625
      %v629 = vmul.f32 %v612, 0.015625
      %v630 = vmul.f32 %v614, 0.015625
      %v631 = vadd.f32 %v615, 1e-05
      %v632 = vadd.f32 %v616, 1e-05
      %v633 = vadd.f32 %v617, 1e-05
      %v634 = vadd.f32 %v618, 1e-05
      %v635 = vadd.f32 %v619, 1e-05
      %v636 = vadd.f32 %v620, 1e-05
      %v637 = vadd.f32 %v621, 1e-05
      %v638 = vadd.f32 %v622, 1e-05
      %v639 = vadd.f32 %v623, 1e-05
      %v640 = vadd.f32 %v624, 1e-05
      %v641 = vadd.f32 %v625, 1e-05
      %v642 = vadd.f32 %v626, 1e-05
      %v643 = vadd.f32 %v627, 1e-05
      %v644 = vadd.f32 %v628, 1e-05
      %v645 = vadd.f32 %v629, 1e-05
      %v646 = vadd.f32 %v630, 1e-05
      %v647 = vrsqrt.pop %v631
      %v648 = vrsqrt.pop %v632
      %v649 = vrsqrt.pop %v633
      %v650 = vrsqrt.pop %v634
      %v651 = vrsqrt.pop %v635
      %v652 = vrsqrt.pop %v636
      %v653 = vrsqrt.pop %v637
      %v654 = vrsqrt.pop %v638
      %v655 = vrsqrt.pop %v639
      %v656 = vrsqrt.pop %v640
      %v657 = vrsqrt.pop %v641
      %v658 = vrsqrt.pop %v642
      %v659 = vrsqrt.pop %v643
      %v660 = vrsqrt.pop %v644
      %v661 = vrsqrt.pop %v645
      %v662 = vrsqrt.pop %v646
      %v663 = vmul.f32 %v551, %v647
      %v664 = vmul.f32 %v552, %v648
      %v665 = vmul.f32 %v553, %v649
      %v666 = vmul.f32 %v554, %v650
      %v667 = vmul.f32 %v555, %v651
      %v668 = vmul.f32 %v556, %v652
      %v669 = vmul.f32 %v557, %v653
      %v670 = vmul.f32 %v558, %v654
      %v671 = vmul.f32 %v559, %v655
      %v672 = vmul.f32 %v560, %v656
      %v673 = vmul.f32 %v561, %v657
      %v674 = vmul.f32 %v562, %v658
      %v675 = vmul.f32 %v563, %v659
      %v676 = vmul.f32 %v564, %v660
      %v677 = vmul.f32 %v565, %v661
      %v678 = vmul.f32 %v566, %v662
      %v679 = vlaneseq
      %v680 = vshrl.u32 %v679, 7
      %v681 = vsub.s32 0, %v680
      %v682 = vrot.slane %v205, %v681
      %v683 = vmul.f32 %v663, %v682
      %v684 = vmul.f32 %v664, %v682
      %v685 = vmul.f32 %v665, %v682
      %v686 = vmul.f32 %v666, %v682
      %v687 = vmul.f32 %v667, %v682
      %v688 = vmul.f32 %v668, %v682
      %v689 = vmul.f32 %v669, %v682
      %v690 = vmul.f32 %v670, %v682
      %v691 = vmul.f32 %v671, %v682
      %v692 = vmul.f32 %v672, %v682
      %v693 = vmul.f32 %v673, %v682
      %v694 = vmul.f32 %v674, %v682
      %v695 = vmul.f32 %v675, %v682
      %v696 = vmul.f32 %v676, %v682
      %v697 = vmul.f32 %v677, %v682
      %v698 = vmul.f32 %v678, %v682
      %v699 = vlaneseq
      %v700 = vshrl.u32 %v699, 7
      %v701 = vsub.s32 0, %v700
      %v702 = vrot.slane %v206, %v701
      %v703 = vadd.f32 %v683, %v702
      %v704 = vadd.f32 %v684, %v702
      %v705 = vadd.f32 %v685, %v702
      %v706 = vadd.f32 %v686, %v702
      %v707 = vadd.f32 %v687, %v702
      %v708 = vadd.f32 %v688, %v702
      %v709 = vadd.f32 %v689, %v702
      %v710 = vadd.f32 %v690, %v702
      %v711 = vadd.f32 %v691, %v702
      %v712 = vadd.f32 %v692, %v702
      %v713 = vadd.f32 %v693, %v702
      %v714 = vadd.f32 %v694, %v702
      %v715 = vadd.f32 %v695, %v702
      %v716 = vadd.f32 %v696, %v702
      %v717 = vadd.f32 %v697, %v702
      %v718 = vadd.f32 %v698, %v702
      %v719 = vmax.f32 %v703, 0.0
      %v720 = vmax.f32 %v704, 0.0
      %v721 = vmax.f32 %v705, 0.0
      %v722 = vmax.f32 %v706, 0.0
      %v723 = vmax.f32 %v707, 0.0
      %v724 = vmax.f32 %v708, 0.0
      %v725 = vmax.f32 %v709, 0.0
      %v726 = vmax.f32 %v710, 0.0
      %v727 = vmax.f32 %v711, 0.0
      %v728 = vmax.f32 %v712, 0.0
      %v729 = vmax.f32 %v713, 0.0
      %v730 = vmax.f32 %v714, 0.0
      %v731 = vmax.f32 %v715, 0.0
      %v732 = vmax.f32 %v716, 0.0
      %v733 = vmax.f32 %v717, 0.0
      %v734 = vmax.f32 %v718, 0.0
      %v735 = vld [vmem:[%s2] sm:$0xff]
      %v736 = vld [vmem:[%s2 + $0x8] sm:$0xff]
      %v737 = vld [vmem:[%s2 + $0x10] sm:$0xff]
      %v738 = vld [vmem:[%s2 + $0x18] sm:$0xff]
      %v739 = vld [vmem:[%s2 + $0x20] sm:$0xff]
      %v740 = vld [vmem:[%s2 + $0x28] sm:$0xff]
      %v741 = vld [vmem:[%s2 + $0x30] sm:$0xff]
      %v742 = vld [vmem:[%s2 + $0x38] sm:$0xff]
      %v743 = vld [vmem:[%s2 + $0x40] sm:$0xff]
      %v744 = vld [vmem:[%s2 + $0x48] sm:$0xff]
      %v745 = vld [vmem:[%s2 + $0x50] sm:$0xff]
      %v746 = vld [vmem:[%s2 + $0x58] sm:$0xff]
      %v747 = vld [vmem:[%s2 + $0x60] sm:$0xff]
      %v748 = vld [vmem:[%s2 + $0x68] sm:$0xff]
      %v749 = vld [vmem:[%s2 + $0x70] sm:$0xff]
      %v750 = vld [vmem:[%s2 + $0x78] sm:$0xff]
      %v751 = vlaneseq
      %v752 = vshrl.u32 %v751, 7
      %v753 = vsub.s32 0, %v752
      %v754 = vrot.slane %v207, %v753
      %755 = vmatprep.subr.mxu0 0.0
      %756 = vmatpush1.msra.mxu0 %v735
      %757 = vmatprep.subr.mxu0 0.0
      %758 = vmatpush1.msra.mxu0 %v736
      %759 = vmatprep.subr.mxu0 0.0
      %760 = vmatpush1.msra.mxu0 %v737
      %761 = vmatprep.subr.mxu0 0.0
      %762 = vmatpush1.msra.mxu0 %v738
      %763 = vmatprep.subr.mxu0 0.0
      %764 = vmatpush1.msra.mxu0 %v739
      %765 = vmatprep.subr.mxu0 0.0
      %766 = vmatpush1.msra.mxu0 %v740
      %767 = vmatprep.subr.mxu0 0.0
      %768 = vmatpush1.msra.mxu0 %v741
      %769 = vmatprep.subr.mxu0 0.0
      %770 = vmatpush1.msra.mxu0 %v742
      %771 = vmatprep.subr.mxu0 0.0
      %772 = vmatpush1.msra.mxu0 %v743
      %773 = vmatprep.subr.mxu0 0.0
      %774 = vmatpush1.msra.mxu0 %v744
      %775 = vmatprep.subr.mxu0 0.0
      %776 = vmatpush1.msra.mxu0 %v745
      %777 = vmatprep.subr.mxu0 0.0
      %778 = vmatpush1.msra.mxu0 %v746
      %779 = vmatprep.subr.mxu0 0.0
      %780 = vmatpush1.msra.mxu0 %v747
      %781 = vmatprep.subr.mxu0 0.0
      %782 = vmatpush1.msra.mxu0 %v748
      %783 = vmatprep.subr.mxu0 0.0
      %784 = vmatpush1.msra.mxu0 %v749
      %785 = vmatprep.subr.mxu0 0.0
      %786 = vmatpush1.msra.mxu0 %v750
      %787 = vmatprep.subr.mxu0 0.0
      %788 = vmatpush1.msra.mxu0 0.0
      %789 = vmatprep.subr.mxu0 0.0
      %790 = vmatpush1.msra.mxu0 0.0
      %791 = vmatprep.subr.mxu0 0.0
      %792 = vmatpush1.msra.mxu0 0.0
      %793 = vmatprep.subr.mxu0 0.0
      %794 = vmatpush1.msra.mxu0 0.0
      %795 = vmatprep.subr.mxu0 0.0
      %796 = vmatpush1.msra.mxu0 0.0
      %797 = vmatprep.subr.mxu0 0.0
      %798 = vmatpush1.msra.mxu0 0.0
      %799 = vmatprep.subr.mxu0 0.0
      %800 = vmatpush1.msra.mxu0 0.0
      %801 = vmatprep.subr.mxu0 0.0
      %802 = vmatpush1.msra.mxu0 0.0
      %803 = vmatprep.subr.mxu0 0.0
      %804 = vmatpush1.msra.mxu0 0.0
      %805 = vmatprep.subr.mxu0 0.0
      %806 = vmatpush1.msra.mxu0 0.0
      %807 = vmatprep.subr.mxu0 0.0
      %808 = vmatpush1.msra.mxu0 0.0
      %809 = vmatprep.subr.mxu0 0.0
      %810 = vmatpush1.msra.mxu0 0.0
      %811 = vmatprep.subr.mxu0 0.0
      %812 = vmatpush1.msra.mxu0 0.0
      %813 = vmatprep.subr.mxu0 0.0
      %814 = vmatpush1.msra.mxu0 0.0
      %815 = vmatprep.subr.mxu0 0.0
      %816 = vmatpush1.msra.mxu0 0.0
      %817 = vmatprep.subr.mxu0 0.0
      %818 = vmatpush1.msra.mxu0 0.0
      %819 = vmatprep.mubr.f32.mxu0 0.0
      %820 = vmatmul.mubr.f32.gmra.mrb[0].mxu0 %v719
      %v821 = vpop.f32.mrb[0].mxu0
      %v822 = vadd.f32 %v754, %v821
      %v823 = vpop.f32.mrb[0].mxu0
      %824 = vmatprep.mubr.f32.mxu0 0.0
      %825 = vmatmul.mubr.f32.gmra.mrb[0].mxu0 %v720
      %v826 = vpop.f32.mrb[0].mxu0
      %v827 = vadd.f32 %v754, %v826
      %v828 = vpop.f32.mrb[0].mxu0
      %829 = vmatprep.mubr.f32.mxu0 0.0
      %830 = vmatmul.mubr.f32.gmra.mrb[0].mxu0 %v721
      %v831 = vpop.f32.mrb[0].mxu0
      %v832 = vadd.f32 %v754, %v831
      %v833 = vpop.f32.mrb[0].mxu0
      %834 = vmatprep.mubr.f32.mxu0 0.0
      %835 = vmatmul.mubr.f32.gmra.mrb[0].mxu0 %v722
      %v836 = vpop.f32.mrb[0].mxu0
      %v837 = vadd.f32 %v754, %v836
      %v838 = vpop.f32.mrb[0].mxu0
      %839 = vmatprep.mubr.f32.mxu0 0.0
      %840 = vmatmul.mubr.f32.gmra.mrb[0].mxu0 %v723
      %v841 = vpop.f32.mrb[0].mxu0
      %v842 = vadd.f32 %v754, %v841
      %v843 = vpop.f32.mrb[0].mxu0
      %844 = vmatprep.mubr.f32.mxu0 0.0
      %845 = vmatmul.mubr.f32.gmra.mrb[0].mxu0 %v724
      %v846 = vpop.f32.mrb[0].mxu0
      %v847 = vadd.f32 %v754, %v846
      %v848 = vpop.f32.mrb[0].mxu0
      %849 = vmatprep.mubr.f32.mxu0 0.0
      %850 = vmatmul.mubr.f32.gmra.mrb[0].mxu0 %v725
      %v851 = vpop.f32.mrb[0].mxu0
      %v852 = vadd.f32 %v754, %v851
      %v853 = vpop.f32.mrb[0].mxu0
      %854 = vmatprep.mubr.f32.mxu0 0.0
      %855 = vmatmul.mubr.f32.gmra.mrb[0].mxu0 %v726
      %v856 = vpop.f32.mrb[0].mxu0
      %v857 = vadd.f32 %v754, %v856
      %v858 = vpop.f32.mrb[0].mxu0
      %859 = vmatprep.mubr.f32.mxu0 0.0
      %860 = vmatmul.mubr.f32.gmra.mrb[0].mxu0 %v727
      %v861 = vpop.f32.mrb[0].mxu0
      %v862 = vadd.f32 %v754, %v861
      %v863 = vpop.f32.mrb[0].mxu0
      %864 = vmatprep.mubr.f32.mxu0 0.0
      %865 = vmatmul.mubr.f32.gmra.mrb[0].mxu0 %v728
      %v866 = vpop.f32.mrb[0].mxu0
      %v867 = vadd.f32 %v754, %v866
      %v868 = vpop.f32.mrb[0].mxu0
      %869 = vmatprep.mubr.f32.mxu0 0.0
      %870 = vmatmul.mubr.f32.gmra.mrb[0].mxu0 %v729
      %v871 = vpop.f32.mrb[0].mxu0
      %v872 = vadd.f32 %v754, %v871
      %v873 = vpop.f32.mrb[0].mxu0
      %874 = vmatprep.mubr.f32.mxu0 0.0
      %875 = vmatmul.mubr.f32.gmra.mrb[0].mxu0 %v730
      %v876 = vpop.f32.mrb[0].mxu0
      %v877 = vadd.f32 %v754, %v876
      %v878 = vpop.f32.mrb[0].mxu0
      %879 = vmatprep.mubr.f32.mxu0 0.0
      %880 = vmatmul.mubr.f32.gmra.mrb[0].mxu0 %v731
      %v881 = vpop.f32.mrb[0].mxu0
      %v882 = vadd.f32 %v754, %v881
      %v883 = vpop.f32.mrb[0].mxu0
      %884 = vmatprep.mubr.f32.mxu0 0.0
      %885 = vmatmul.mubr.f32.gmra.mrb[0].mxu0 %v732
      %v886 = vpop.f32.mrb[0].mxu0
      %v887 = vadd.f32 %v754, %v886
      %v888 = vpop.f32.mrb[0].mxu0
      %889 = vmatprep.mubr.f32.mxu0 0.0
      %890 = vmatmul.mubr.f32.gmra.mrb[0].mxu0 %v733
      %v891 = vpop.f32.mrb[0].mxu0
      %v892 = vadd.f32 %v754, %v891
      %v893 = vpop.f32.mrb[0].mxu0
      %894 = vmatprep.mubr.f32.mxu0 0.0
      %895 = vmatmul.mubr.f32.gmra.mrb[0].mxu0 %v734
      %v896 = vpop.f32.mrb[0].mxu0
      %v897 = vadd.f32 %v754, %v896
      %v898 = vpop.f32.mrb[0].mxu0
      %899 = vdwg.mxu0
      %900 = vadd.xlane.f32.xlu0 %v822
      %v901 = vpop.xlane.xlu0 %900
      %902 = vadd.xlane.f32.xlu0 %v827
      %v903 = vpop.xlane.xlu0 %902
      %904 = vadd.xlane.f32.xlu0 %v832
      %v905 = vpop.xlane.xlu0 %904
      %906 = vadd.xlane.f32.xlu0 %v837
      %v907 = vpop.xlane.xlu0 %906
      %908 = vadd.xlane.f32.xlu0 %v842
      %v909 = vpop.xlane.xlu0 %908
      %910 = vadd.xlane.f32.xlu0 %v847
      %v911 = vpop.xlane.xlu0 %910
      %912 = vadd.xlane.f32.xlu0 %v852
      %v913 = vpop.xlane.xlu0 %912
      %914 = vadd.xlane.f32.xlu0 %v857
      %v915 = vpop.xlane.xlu0 %914
      %916 = vadd.xlane.f32.xlu0 %v862
      %v917 = vpop.xlane.xlu0 %916
      %918 = vadd.xlane.f32.xlu0 %v867
      %v919 = vpop.xlane.xlu0 %918
      %920 = vadd.xlane.f32.xlu0 %v872
      %v921 = vpop.xlane.xlu0 %920
      %922 = vadd.xlane.f32.xlu0 %v877
      %v923 = vpop.xlane.xlu0 %922
      %924 = vadd.xlane.f32.xlu0 %v882
      %v925 = vpop.xlane.xlu0 %924
      %926 = vadd.xlane.f32.xlu0 %v887
      %v927 = vpop.xlane.xlu0 %926
      %928 = vadd.xlane.f32.xlu0 %v892
      %v929 = vpop.xlane.xlu0 %928
      %930 = vadd.xlane.f32.xlu0 %v897
      %v931 = vpop.xlane.xlu0 %930
      %v932 = vmul.f32 %v901, 0.015625
      %v933 = vmul.f32 %v903, 0.015625
      %v934 = vmul.f32 %v905, 0.015625
      %v935 = vmul.f32 %v907, 0.015625
      %v936 = vmul.f32 %v909, 0.015625
      %v937 = vmul.f32 %v911, 0.015625
      %v938 = vmul.f32 %v913, 0.015625
      %v939 = vmul.f32 %v915, 0.015625
      %v940 = vmul.f32 %v917, 0.015625
      %v941 = vmul.f32 %v919, 0.015625
      %v942 = vmul.f32 %v921, 0.015625
      %v943 = vmul.f32 %v923, 0.015625
      %v944 = vmul.f32 %v925, 0.015625
      %v945 = vmul.f32 %v927, 0.015625
      %v946 = vmul.f32 %v929, 0.015625
      %v947 = vmul.f32 %v931, 0.015625
      %v948 = vsub.f32 %v822, %v932
      %v949 = vsub.f32 %v827, %v933
      %v950 = vsub.f32 %v832, %v934
      %v951 = vsub.f32 %v837, %v935
      %v952 = vsub.f32 %v842, %v936
      %v953 = vsub.f32 %v847, %v937
      %v954 = vsub.f32 %v852, %v938
      %v955 = vsub.f32 %v857, %v939
      %v956 = vsub.f32 %v862, %v940
      %v957 = vsub.f32 %v867, %v941
      %v958 = vsub.f32 %v872, %v942
      %v959 = vsub.f32 %v877, %v943
      %v960 = vsub.f32 %v882, %v944
      %v961 = vsub.f32 %v887, %v945
      %v962 = vsub.f32 %v892, %v946
      %v963 = vsub.f32 %v897, %v947
      %v964 = vsel %vm550, %v948, 0.0
      %v965 = vsel %vm550, %v949, 0.0
      %v966 = vsel %vm550, %v950, 0.0
      %v967 = vsel %vm550, %v951, 0.0
      %v968 = vsel %vm550, %v952, 0.0
      %v969 = vsel %vm550, %v953, 0.0
      %v970 = vsel %vm550, %v954, 0.0
      %v971 = vsel %vm550, %v955, 0.0
      %v972 = vsel %vm550, %v956, 0.0
      %v973 = vsel %vm550, %v957, 0.0
      %v974 = vsel %vm550, %v958, 0.0
      %v975 = vsel %vm550, %v959, 0.0
      %v976 = vsel %vm550, %v960, 0.0
      %v977 = vsel %vm550, %v961, 0.0
      %v978 = vsel %vm550, %v962, 0.0
      %v979 = vsel %vm550, %v963, 0.0
      %v980 = vmul.f32 %v964, %v964
      %v981 = vmul.f32 %v965, %v965
      %v982 = vmul.f32 %v966, %v966
      %v983 = vmul.f32 %v967, %v967
      %v984 = vmul.f32 %v968, %v968
      %v985 = vmul.f32 %v969, %v969
      %v986 = vmul.f32 %v970, %v970
      %v987 = vmul.f32 %v971, %v971
      %v988 = vmul.f32 %v972, %v972
      %v989 = vmul.f32 %v973, %v973
      %v990 = vmul.f32 %v974, %v974
      %v991 = vmul.f32 %v975, %v975
      %v992 = vmul.f32 %v976, %v976
      %v993 = vmul.f32 %v977, %v977
      %v994 = vmul.f32 %v978, %v978
      %v995 = vmul.f32 %v979, %v979
      %996 = vadd.xlane.f32.xlu0 %v980
      %v997 = vpop.xlane.xlu0 %996
      %998 = vadd.xlane.f32.xlu0 %v981
      %v999 = vpop.xlane.xlu0 %998
      %1000 = vadd.xlane.f32.xlu0 %v982
      %v1001 = vpop.xlane.xlu0 %1000
      %1002 = vadd.xlane.f32.xlu0 %v983
      %v1003 = vpop.xlane.xlu0 %1002
      %1004 = vadd.xlane.f32.xlu0 %v984
      %v1005 = vpop.xlane.xlu0 %1004
      %1006 = vadd.xlane.f32.xlu0 %v985
      %v1007 = vpop.xlane.xlu0 %1006
      %1008 = vadd.xlane.f32.xlu0 %v986
      %v1009 = vpop.xlane.xlu0 %1008
      %1010 = vadd.xlane.f32.xlu0 %v987
      %v1011 = vpop.xlane.xlu0 %1010
      %1012 = vadd.xlane.f32.xlu0 %v988
      %v1013 = vpop.xlane.xlu0 %1012
      %1014 = vadd.xlane.f32.xlu0 %v989
      %v1015 = vpop.xlane.xlu0 %1014
      %1016 = vadd.xlane.f32.xlu0 %v990
      %v1017 = vpop.xlane.xlu0 %1016
      %1018 = vadd.xlane.f32.xlu0 %v991
      %v1019 = vpop.xlane.xlu0 %1018
      %1020 = vadd.xlane.f32.xlu0 %v992
      %v1021 = vpop.xlane.xlu0 %1020
      %1022 = vadd.xlane.f32.xlu0 %v993
      %v1023 = vpop.xlane.xlu0 %1022
      %1024 = vadd.xlane.f32.xlu0 %v994
      %v1025 = vpop.xlane.xlu0 %1024
      %1026 = vadd.xlane.f32.xlu0 %v995
      %v1027 = vpop.xlane.xlu0 %1026
      %v1028 = vmul.f32 %v997, 0.015625
      %v1029 = vmul.f32 %v999, 0.015625
      %v1030 = vmul.f32 %v1001, 0.015625
      %v1031 = vmul.f32 %v1003, 0.015625
      %v1032 = vmul.f32 %v1005, 0.015625
      %v1033 = vmul.f32 %v1007, 0.015625
      %v1034 = vmul.f32 %v1009, 0.015625
      %v1035 = vmul.f32 %v1011, 0.015625
      %v1036 = vmul.f32 %v1013, 0.015625
      %v1037 = vmul.f32 %v1015, 0.015625
      %v1038 = vmul.f32 %v1017, 0.015625
      %v1039 = vmul.f32 %v1019, 0.015625
      %v1040 = vmul.f32 %v1021, 0.015625
      %v1041 = vmul.f32 %v1023, 0.015625
      %v1042 = vmul.f32 %v1025, 0.015625
      %v1043 = vmul.f32 %v1027, 0.015625
      %v1044 = vadd.f32 %v1028, 1e-05
      %v1045 = vadd.f32 %v1029, 1e-05
      %v1046 = vadd.f32 %v1030, 1e-05
      %v1047 = vadd.f32 %v1031, 1e-05
      %v1048 = vadd.f32 %v1032, 1e-05
      %v1049 = vadd.f32 %v1033, 1e-05
      %v1050 = vadd.f32 %v1034, 1e-05
      %v1051 = vadd.f32 %v1035, 1e-05
      %v1052 = vadd.f32 %v1036, 1e-05
      %v1053 = vadd.f32 %v1037, 1e-05
      %v1054 = vadd.f32 %v1038, 1e-05
      %v1055 = vadd.f32 %v1039, 1e-05
      %v1056 = vadd.f32 %v1040, 1e-05
      %v1057 = vadd.f32 %v1041, 1e-05
      %v1058 = vadd.f32 %v1042, 1e-05
      %v1059 = vadd.f32 %v1043, 1e-05
      %v1060 = vrsqrt.pop %v1044
      %v1061 = vrsqrt.pop %v1045
      %v1062 = vrsqrt.pop %v1046
      %v1063 = vrsqrt.pop %v1047
      %v1064 = vrsqrt.pop %v1048
      %v1065 = vrsqrt.pop %v1049
      %v1066 = vrsqrt.pop %v1050
      %v1067 = vrsqrt.pop %v1051
      %v1068 = vrsqrt.pop %v1052
      %v1069 = vrsqrt.pop %v1053
      %v1070 = vrsqrt.pop %v1054
      %v1071 = vrsqrt.pop %v1055
      %v1072 = vrsqrt.pop %v1056
      %v1073 = vrsqrt.pop %v1057
      %v1074 = vrsqrt.pop %v1058
      %v1075 = vrsqrt.pop %v1059
      %v1076 = vmul.f32 %v964, %v1060
      %v1077 = vmul.f32 %v965, %v1061
      %v1078 = vmul.f32 %v966, %v1062
      %v1079 = vmul.f32 %v967, %v1063
      %v1080 = vmul.f32 %v968, %v1064
      %v1081 = vmul.f32 %v969, %v1065
      %v1082 = vmul.f32 %v970, %v1066
      %v1083 = vmul.f32 %v971, %v1067
      %v1084 = vmul.f32 %v972, %v1068
      %v1085 = vmul.f32 %v973, %v1069
      %v1086 = vmul.f32 %v974, %v1070
      %v1087 = vmul.f32 %v975, %v1071
      %v1088 = vmul.f32 %v976, %v1072
      %v1089 = vmul.f32 %v977, %v1073
      %v1090 = vmul.f32 %v978, %v1074
      %v1091 = vmul.f32 %v979, %v1075
      %v1092 = vlaneseq
      %v1093 = vshrl.u32 %v1092, 7
      %v1094 = vsub.s32 0, %v1093
      %v1095 = vrot.slane %v208, %v1094
      %v1096 = vmul.f32 %v1076, %v1095
      %v1097 = vmul.f32 %v1077, %v1095
      %v1098 = vmul.f32 %v1078, %v1095
      %v1099 = vmul.f32 %v1079, %v1095
      %v1100 = vmul.f32 %v1080, %v1095
      %v1101 = vmul.f32 %v1081, %v1095
      %v1102 = vmul.f32 %v1082, %v1095
      %v1103 = vmul.f32 %v1083, %v1095
      %v1104 = vmul.f32 %v1084, %v1095
      %v1105 = vmul.f32 %v1085, %v1095
      %v1106 = vmul.f32 %v1086, %v1095
      %v1107 = vmul.f32 %v1087, %v1095
      %v1108 = vmul.f32 %v1088, %v1095
      %v1109 = vmul.f32 %v1089, %v1095
      %v1110 = vmul.f32 %v1090, %v1095
      %v1111 = vmul.f32 %v1091, %v1095
      %v1112 = vlaneseq
      %v1113 = vshrl.u32 %v1112, 7
      %v1114 = vsub.s32 0, %v1113
      %v1115 = vrot.slane %v209, %v1114
      %v1116 = vadd.f32 %v1096, %v1115
      %v1117 = vadd.f32 %v1097, %v1115
      %v1118 = vadd.f32 %v1098, %v1115
      %v1119 = vadd.f32 %v1099, %v1115
      %v1120 = vadd.f32 %v1100, %v1115
      %v1121 = vadd.f32 %v1101, %v1115
      %v1122 = vadd.f32 %v1102, %v1115
      %v1123 = vadd.f32 %v1103, %v1115
      %v1124 = vadd.f32 %v1104, %v1115
      %v1125 = vadd.f32 %v1105, %v1115
      %v1126 = vadd.f32 %v1106, %v1115
      %v1127 = vadd.f32 %v1107, %v1115
      %v1128 = vadd.f32 %v1108, %v1115
      %v1129 = vadd.f32 %v1109, %v1115
      %v1130 = vadd.f32 %v1110, %v1115
      %v1131 = vadd.f32 %v1111, %v1115
      %v1132 = vmax.f32 %v1116, 0.0
      %v1133 = vmax.f32 %v1117, 0.0
      %v1134 = vmax.f32 %v1118, 0.0
      %v1135 = vmax.f32 %v1119, 0.0
      %v1136 = vmax.f32 %v1120, 0.0
      %v1137 = vmax.f32 %v1121, 0.0
      %v1138 = vmax.f32 %v1122, 0.0
      %v1139 = vmax.f32 %v1123, 0.0
      %v1140 = vmax.f32 %v1124, 0.0
      %v1141 = vmax.f32 %v1125, 0.0
      %v1142 = vmax.f32 %v1126, 0.0
      %v1143 = vmax.f32 %v1127, 0.0
      %v1144 = vmax.f32 %v1128, 0.0
      %v1145 = vmax.f32 %v1129, 0.0
      %v1146 = vmax.f32 %v1130, 0.0
      %v1147 = vmax.f32 %v1131, 0.0
      %v1148 = vadd.f32 %v1132, %v469
      %v1149 = vadd.f32 %v1133, %v470
      %v1150 = vadd.f32 %v1134, %v471
      %v1151 = vadd.f32 %v1135, %v472
      %v1152 = vadd.f32 %v1136, %v473
      %v1153 = vadd.f32 %v1137, %v474
      %v1154 = vadd.f32 %v1138, %v475
      %v1155 = vadd.f32 %v1139, %v476
      %v1156 = vadd.f32 %v1140, %v477
      %v1157 = vadd.f32 %v1141, %v478
      %v1158 = vadd.f32 %v1142, %v479
      %v1159 = vadd.f32 %v1143, %v480
      %v1160 = vadd.f32 %v1144, %v481
      %v1161 = vadd.f32 %v1145, %v482
      %v1162 = vadd.f32 %v1146, %v483
      %v1163 = vadd.f32 %v1147, %v484
      %vm1164 = vcmask 523264
      %1165 = vst.msk [vmem:[%s199] sm:$0xff] %vm1164, %v1148
      %1166 = vst.msk [vmem:[%s199 + $0x8] sm:$0xff] %vm1164, %v1149
      %1167 = vst.msk [vmem:[%s199 + $0x10] sm:$0xff] %vm1164, %v1150
      %1168 = vst.msk [vmem:[%s199 + $0x18] sm:$0xff] %vm1164, %v1151
      %1169 = vst.msk [vmem:[%s199 + $0x20] sm:$0xff] %vm1164, %v1152
      %1170 = vst.msk [vmem:[%s199 + $0x28] sm:$0xff] %vm1164, %v1153
      %1171 = vst.msk [vmem:[%s199 + $0x30] sm:$0xff] %vm1164, %v1154
      %1172 = vst.msk [vmem:[%s199 + $0x38] sm:$0xff] %vm1164, %v1155
      %1173 = vst.msk [vmem:[%s199 + $0x40] sm:$0xff] %vm1164, %v1156
      %1174 = vst.msk [vmem:[%s199 + $0x48] sm:$0xff] %vm1164, %v1157
      %1175 = vst.msk [vmem:[%s199 + $0x50] sm:$0xff] %vm1164, %v1158
      %1176 = vst.msk [vmem:[%s199 + $0x58] sm:$0xff] %vm1164, %v1159
      %1177 = vst.msk [vmem:[%s199 + $0x60] sm:$0xff] %vm1164, %v1160
      %1178 = vst.msk [vmem:[%s199 + $0x68] sm:$0xff] %vm1164, %v1161
      %1179 = vst.msk [vmem:[%s199 + $0x70] sm:$0xff] %vm1164, %v1162
      %1180 = vst.msk [vmem:[%s199 + $0x78] sm:$0xff] %vm1164, %v1163
      %s1181 = smul.u32 16, %s15
      %p1182 = scmp.lt.s32.totalorder %s1181, 31
      %s1183 = scalar_select %p1182, %s1181, 31
      %s1184 = smul.addr %s1183, 8
      %s1185 = scalar_lea.vmem %s4, %s1184
      // Predicated region
      $region37: #{tpu_custom_call.1} parent=35 // pred_check
        %p1186 = pneg %p122
      $region38: #{tpu_custom_call.1} parent=35 // pred_check_branch
        %1188 = sbr.rel (%p1186) target = $region40
      $region39: #{tpu_custom_call.1} parent=35 // pred_region
        %s1189 = smul.u32 16, %s15
      $region40: #{tpu_custom_call.1} parent=35 // pred_fallthru
        _
    $region36: #{tpu_custom_call.1} parent=5 // pred_fallthru
      _
    %p1190 = scmp.le.s32.totalorder 2, %s10
    // Predicated region
    $region41: #{tpu_custom_call.1} parent=5 // pred_check
      %p1191 = pneg %p1190
    $region42: #{tpu_custom_call.1} parent=5 // pred_check_branch
      %1193 = sbr.rel (%p1191) target = $region44
    $region43: #{tpu_custom_call.1} parent=5 // pred_region
      %s1194 = ssub.s32 %s10, 2
      // Predicated region
      $region45: #{tpu_custom_call.1} parent=43 // pred_check
        %p1195 = pneg %p128
      $region46: #{tpu_custom_call.1} parent=43 // pred_check_branch
        %1197 = sbr.rel (%p1195) target = $region48
      $region47: #{tpu_custom_call.1} parent=43 // pred_region
        %s1198 = smul.u32 16, %s16
        %p1199 = scmp.lt.s32.totalorder %s1198, 31
        %s1200 = scalar_select %p1199, %s1198, 31
        %s1201 = smul.addr %s1200, 8
        %s1202 = scalar_lea.vmem %s4, %s1201
      $region48: #{tpu_custom_call.1} parent=43 // pred_fallthru
        _
    $region44: #{tpu_custom_call.1} parent=5 // pred_fallthru
      _
  $region6: #{tpu_custom_call.1} parent=0 // loop_footer
    %s14 = sadd.s32 1, %s10
  $region7: #{tpu_custom_call.1} parent=0 // loop_footer_branch
    %9 = sbr.rel target = $region3
  $region8: #{tpu_custom_call.1} parent=0 // loop_exit
    _

</llo_original>
